<compile_context>
chip_gen: v7x
topology: tpu7x:2x2x1
jax: 0.10.0
libtpu: 0.0.40
codegen_flags: <defaults>
</compile_context>

<pallas_src>
import numpy as np
import jax
import jax.numpy as jnp
from jax.experimental import pallas as pl
from jax.experimental.pallas import tpu as pltpu

BN_EPS = 1e-5


def _dynamic_graph_kernel(x_ref, w_ref, bias_ref, bd_ref, cd_ref, sl_ref, sr_ref,
                          gamma_ref, beta_ref, out_ref):
    f32 = jnp.float32
    N = gamma_ref.shape[0]              # num_nodes
    NCo = sr_ref.shape[0]               # num_nodes * conv_out_dim
    B = sl_ref.shape[0] // N            # batch size

    # ---- all 2*N per-node Conv1d's as one block-diagonal matmul (MXU) ----
    conv = jnp.dot(x_ref[...], w_ref[...], preferred_element_type=f32) + bias_ref[...]
    TH = conv[:, :NCo]                  # (B*L, N*Co)  theta conv output, col = n*Co + co
    PH = conv[:, NCo:]                  # (B*L, N*Co)  phi  conv output

    # ---- per-batch gram on the MXU ----
    # batch-block-diagonal theta: TH_bd[r, b*N*Co + x] = TH[r, x] * [row r belongs to batch b]
    TH_bd = jnp.concatenate([TH] * B, axis=1) * bd_ref[...]         # (B*L, B*N*Co)
    G = jnp.dot(TH_bd.T, PH, preferred_element_type=f32)            # (B*N*Co, N*Co)
    # block-trace pooling: tmp[b*N+i, j] = sum_co G[b*N*Co + i*Co + co, j*Co + co]
    tmp = jnp.dot(jnp.dot(sl_ref[...], G * cd_ref[...], preferred_element_type=f32),
                  sr_ref[...], preferred_element_type=f32)          # (B*N, N)

    ok = jnp.tanh(tmp)

    # ---- BatchNorm1d(num_nodes), training-mode (biased) batch statistics over (batch, j) ----
    acc = ok[0:N, :]
    for b in range(1, B):
        acc = acc + ok[b * N:(b + 1) * N, :]
    mean = jnp.sum(acc, axis=1, keepdims=True) / (B * N)            # (N, 1)
    sq = (ok[0:N, :] - mean) ** 2
    for b in range(1, B):
        sq = sq + (ok[b * N:(b + 1) * N, :] - mean) ** 2
    var = jnp.sum(sq, axis=1, keepdims=True) / (B * N)              # (N, 1)
    inv = jax.lax.rsqrt(var + BN_EPS)

    scale = gamma_ref[...] * inv                                    # (N, 1)
    shift = beta_ref[...] - scale * mean
    scale_full = jnp.concatenate([scale] * B, axis=0)               # (B*N, 1)
    shift_full = jnp.concatenate([shift] * B, axis=0)
    out_ref[...] = jnp.maximum(ok * scale_full + shift_full, 0.0)   # ReLU


def dynamic_graph_forward(features, w_theta, b_theta, w_phi, b_phi, gamma, beta):
    """features: (B, T, N, C); conv weights: (N, Co, C, F); biases: (N, Co); gamma/beta: (N,)"""
    f32 = jnp.float32
    B, T, N, C = features.shape
    Co, F = w_theta.shape[1], w_theta.shape[3]
    L = T - F + 1
    NC, NCo = N * C, N * Co
    KK, BL = F * NC, B * L

    # --- im2col, lane-dense: X[b*L + l, f*NC + n*C + c] = features[b, l+f, n, c] ---
    xf = features.astype(f32).reshape(B, T, NC)
    X = jnp.concatenate([xf[:, f:f + L, :].reshape(BL, NC) for f in range(F)], axis=-1)

    # --- fused block-diagonal conv weight (theta | phi) and fused bias ---
    eye = jnp.eye(N, dtype=f32)

    def block_diag(w):                   # (N, Co, C, F) -> (F*N*C, N*Co), zero off-node
        wt = jnp.transpose(w.astype(f32), (3, 0, 2, 1))              # (F, N, C, Co)
        return jnp.einsum('fnco,nm->fncmo', wt, eye).reshape(KK, NCo)

    W = jnp.concatenate([block_diag(w_theta), block_diag(w_phi)], axis=1)       # (KK, 2*NCo)
    bias = jnp.concatenate([b_theta.astype(f32).reshape(NCo),
                            b_phi.astype(f32).reshape(NCo)]).reshape(1, 2 * NCo)

    # --- constant 0/1 selector / mask matrices (host-built, tiny) ---
    r = np.arange(BL)[:, None]
    s = np.arange(B * NCo)
    y = np.arange(NCo)
    BD = jnp.asarray((r // L) == (s[None, :] // NCo), dtype=f32)                # (B*L, B*NCo)
    CD = jnp.asarray((s[:, None] % Co) == (y[None, :] % Co), dtype=f32)         # (B*NCo, NCo)
    SL = jnp.asarray((s[None, :] // Co) == np.arange(B * N)[:, None], dtype=f32)  # (B*N, B*NCo)
    SR = jnp.asarray((y[:, None] // Co) == np.arange(N)[None, :], dtype=f32)      # (NCo, N)

    out_flat = pl.pallas_call(
        _dynamic_graph_kernel,
        out_shape=jax.ShapeDtypeStruct((B * N, N), f32),
        in_specs=[pl.BlockSpec(memory_space=pltpu.MemorySpace.VMEM)] * 9,
        out_specs=pl.BlockSpec(memory_space=pltpu.MemorySpace.VMEM),
    )(X, W, bias, BD, CD, SL, SR,
      gamma.astype(f32).reshape(N, 1), beta.astype(f32).reshape(N, 1))

    return out_flat.reshape(B, N, N)


def _reference(features, w_theta, b_theta, w_phi, b_phi, gamma, beta):
    """Plain-JAX reference mirroring the PyTorch forward (training-mode BatchNorm)."""
    B, T, N, C = features.shape
    Co, F = w_theta.shape[1], w_theta.shape[3]
    L = T - F + 1

    def conv_all(w, bias):
        taps = jnp.stack([features[:, f:f + L, :, :] for f in range(F)], axis=-1)   # (B,L,N,C,F)
        return jnp.einsum('blncf,nocf->bnol', taps, w) + bias[None, :, :, None]     # (B,N,Co,L)

    th = conv_all(w_theta, b_theta).reshape(B, N, Co * L)
    ph = conv_all(w_phi, b_phi).reshape(B, N, Co * L)
    tmp = jnp.einsum('bim,bjm->bij', th, ph)
    ok = jnp.tanh(tmp)
    mean = jnp.mean(ok, axis=(0, 2), keepdims=True)
    var = jnp.mean((ok - mean) ** 2, axis=(0, 2), keepdims=True)
    y = (ok - mean) / jnp.sqrt(var + BN_EPS) * gamma[None, :, None] + beta[None, :, None]
    return jnp.maximum(y, 0.0)


if __name__ == "__main__":
    key = jax.random.PRNGKey(0)
    # small shapes consistent with the module: num_nodes=4, in_dim=4, conv_out_dim=8, F=3
    B, T, N, C, Co, F = 2, 16, 4, 4, 8, 3
    k1, k2, k3, k4, k5, k6, k7 = jax.random.split(key, 7)

    features = jax.random.normal(k1, (B, T, N, C), jnp.float32)
    w_theta = 0.1 * jax.random.normal(k2, (N, Co, C, F), jnp.float32)
    b_theta = 0.1 * jax.random.normal(k3, (N, Co), jnp.float32)
    w_phi = 0.1 * jax.random.normal(k4, (N, Co, C, F), jnp.float32)
    b_phi = 0.1 * jax.random.normal(k5, (N, Co), jnp.float32)
    gamma = 1.0 + 0.1 * jax.random.normal(k6, (N,), jnp.float32)
    beta = 0.1 * jax.random.normal(k7, (N,), jnp.float32)

    out = dynamic_graph_forward(features, w_theta, b_theta, w_phi, b_phi, gamma, beta)
    out = jax.block_until_ready(out)

    ref = _reference(features, w_theta, b_theta, w_phi, b_phi, gamma, beta)
    assert out.shape == (B, N, N)
    max_err = float(jnp.max(jnp.abs(out - ref)))
    assert jnp.allclose(out, ref, atol=2e-4, rtol=2e-4), max_err
    print("KERNEL_OK")
</pallas_src>

<mosaic_0001>
module attributes {stable_mosaic.version = 11 : i64} {
  func.func @_dynamic_graph_kernel(%arg0: memref<28x48xf32, #tpu.memory_space<vmem>>, %arg1: memref<48x64xf32, #tpu.memory_space<vmem>>, %arg2: memref<1x64xf32, #tpu.memory_space<vmem>>, %arg3: memref<28x64xf32, #tpu.memory_space<vmem>>, %arg4: memref<64x32xf32, #tpu.memory_space<vmem>>, %arg5: memref<8x64xf32, #tpu.memory_space<vmem>>, %arg6: memref<32x4xf32, #tpu.memory_space<vmem>>, %arg7: memref<4x1xf32, #tpu.memory_space<vmem>>, %arg8: memref<4x1xf32, #tpu.memory_space<vmem>>, %arg9: memref<8x4xf32, #tpu.memory_space<vmem>>) attributes {dimension_semantics = [], scalar_prefetch = 0 : i64, scratch_operands = 0 : i64, tpu.core_type = #tpu.core_type<tc>} {
    %c0 = arith.constant 0 : index
    %c0_0 = arith.constant 0 : index
    %0 = vector.load %arg0[%c0, %c0_0] : memref<28x48xf32, #tpu.memory_space<vmem>>, vector<28x48xf32>
    %c0_1 = arith.constant 0 : index
    %c0_2 = arith.constant 0 : index
    %1 = vector.load %arg1[%c0_1, %c0_2] : memref<48x64xf32, #tpu.memory_space<vmem>>, vector<48x64xf32>
    %cst = arith.constant dense<0.000000e+00> : vector<28x64xf32>
    %2 = tpu.matmul %0, %1, %cst {dimension_numbers = #tpu.dot_dimension_numbers<[1], [0], [0], [1], [0, 0, 1, 1], [], []>} : vector<28x48xf32>, vector<48x64xf32>, vector<28x64xf32> -> vector<28x64xf32>
    %c0_3 = arith.constant 0 : index
    %c0_4 = arith.constant 0 : index
    %3 = vector.load %arg2[%c0_3, %c0_4] : memref<1x64xf32, #tpu.memory_space<vmem>>, vector<1x64xf32>
    %4 = vector.broadcast %3 : vector<1x64xf32> to vector<28x64xf32>
    %5 = arith.addf %2, %4 : vector<28x64xf32>
    %6 = vector.extract_strided_slice %5 {offsets = [0, 0], sizes = [28, 32], strides = [1, 1]} : vector<28x64xf32> to vector<28x32xf32>
    %7 = vector.extract_strided_slice %5 {offsets = [0, 32], sizes = [28, 32], strides = [1, 1]} : vector<28x64xf32> to vector<28x32xf32>
    %8 = tpu.concatenate %6, %6 in 1 : vector<28x32xf32>, vector<28x32xf32> -> vector<28x64xf32>
    %c0_5 = arith.constant 0 : index
    %c0_6 = arith.constant 0 : index
    %9 = vector.load %arg3[%c0_5, %c0_6] : memref<28x64xf32, #tpu.memory_space<vmem>>, vector<28x64xf32>
    %10 = arith.mulf %8, %9 : vector<28x64xf32>
    %11 = tpu.transpose %10, [1, 0] : vector<28x64xf32> -> vector<64x28xf32>
    %cst_7 = arith.constant dense<0.000000e+00> : vector<64x32xf32>
    %12 = tpu.matmul %11, %7, %cst_7 {dimension_numbers = #tpu.dot_dimension_numbers<[1], [0], [0], [1], [0, 0, 1, 1], [], []>} : vector<64x28xf32>, vector<28x32xf32>, vector<64x32xf32> -> vector<64x32xf32>
    %c0_8 = arith.constant 0 : index
    %c0_9 = arith.constant 0 : index
    %13 = vector.load %arg5[%c0_8, %c0_9] : memref<8x64xf32, #tpu.memory_space<vmem>>, vector<8x64xf32>
    %c0_10 = arith.constant 0 : index
    %c0_11 = arith.constant 0 : index
    %14 = vector.load %arg4[%c0_10, %c0_11] : memref<64x32xf32, #tpu.memory_space<vmem>>, vector<64x32xf32>
    %15 = arith.mulf %12, %14 : vector<64x32xf32>
    %cst_12 = arith.constant dense<0.000000e+00> : vector<8x32xf32>
    %16 = tpu.matmul %13, %15, %cst_12 {dimension_numbers = #tpu.dot_dimension_numbers<[1], [0], [0], [1], [0, 0, 1, 1], [], []>} : vector<8x64xf32>, vector<64x32xf32>, vector<8x32xf32> -> vector<8x32xf32>
    %c0_13 = arith.constant 0 : index
    %c0_14 = arith.constant 0 : index
    %17 = vector.load %arg6[%c0_13, %c0_14] : memref<32x4xf32, #tpu.memory_space<vmem>>, vector<32x4xf32>
    %cst_15 = arith.constant dense<0.000000e+00> : vector<8x4xf32>
    %18 = tpu.matmul %16, %17, %cst_15 {dimension_numbers = #tpu.dot_dimension_numbers<[1], [0], [0], [1], [0, 0, 1, 1], [], []>} : vector<8x32xf32>, vector<32x4xf32>, vector<8x4xf32> -> vector<8x4xf32>
    %19 = math.tanh %18 : vector<8x4xf32>
    %20 = vector.extract_strided_slice %19 {offsets = [0, 0], sizes = [4, 4], strides = [1, 1]} : vector<8x4xf32> to vector<4x4xf32>
    %21 = vector.extract_strided_slice %19 {offsets = [4, 0], sizes = [4, 4], strides = [1, 1]} : vector<8x4xf32> to vector<4x4xf32>
    %22 = arith.addf %20, %21 : vector<4x4xf32>
    %cst_16 = arith.constant dense<0.000000e+00> : vector<4xf32>
    %23 = vector.multi_reduction <add>, %22, %cst_16 [1] : vector<4x4xf32> to vector<4xf32>
    %24 = vector.shape_cast %23 : vector<4xf32> to vector<4x1xf32>
    %cst_17 = arith.constant 8.000000e+00 : f32
    %25 = vector.broadcast %cst_17 : f32 to vector<4x1xf32>
    %26 = arith.divf %24, %25 : vector<4x1xf32>
    %27 = vector.extract_strided_slice %19 {offsets = [0, 0], sizes = [4, 4], strides = [1, 1]} : vector<8x4xf32> to vector<4x4xf32>
    %28 = vector.broadcast %26 : vector<4x1xf32> to vector<4x4xf32>
    %29 = arith.subf %27, %28 : vector<4x4xf32>
    %30 = arith.mulf %29, %29 : vector<4x4xf32>
    %31 = vector.extract_strided_slice %19 {offsets = [4, 0], sizes = [4, 4], strides = [1, 1]} : vector<8x4xf32> to vector<4x4xf32>
    %32 = vector.broadcast %26 : vector<4x1xf32> to vector<4x4xf32>
    %33 = arith.subf %31, %32 : vector<4x4xf32>
    %34 = arith.mulf %33, %33 : vector<4x4xf32>
    %35 = arith.addf %30, %34 : vector<4x4xf32>
    %cst_18 = arith.constant dense<0.000000e+00> : vector<4xf32>
    %36 = vector.multi_reduction <add>, %35, %cst_18 [1] : vector<4x4xf32> to vector<4xf32>
    %37 = vector.shape_cast %36 : vector<4xf32> to vector<4x1xf32>
    %cst_19 = arith.constant 8.000000e+00 : f32
    %38 = vector.broadcast %cst_19 : f32 to vector<4x1xf32>
    %39 = arith.divf %37, %38 : vector<4x1xf32>
    %cst_20 = arith.constant 9.99999974E-6 : f32
    %40 = vector.broadcast %cst_20 : f32 to vector<4x1xf32>
    %41 = arith.addf %39, %40 : vector<4x1xf32>
    %42 = math.rsqrt %41 : vector<4x1xf32>
    %c0_21 = arith.constant 0 : index
    %c0_22 = arith.constant 0 : index
    %43 = vector.load %arg7[%c0_21, %c0_22] : memref<4x1xf32, #tpu.memory_space<vmem>>, vector<4x1xf32>
    %44 = arith.mulf %43, %42 : vector<4x1xf32>
    %c0_23 = arith.constant 0 : index
    %c0_24 = arith.constant 0 : index
    %45 = vector.load %arg8[%c0_23, %c0_24] : memref<4x1xf32, #tpu.memory_space<vmem>>, vector<4x1xf32>
    %46 = arith.mulf %44, %26 : vector<4x1xf32>
    %47 = arith.subf %45, %46 : vector<4x1xf32>
    %48 = tpu.concatenate %44, %44 in 0 : vector<4x1xf32>, vector<4x1xf32> -> vector<8x1xf32>
    %49 = tpu.concatenate %47, %47 in 0 : vector<4x1xf32>, vector<4x1xf32> -> vector<8x1xf32>
    %50 = vector.broadcast %48 : vector<8x1xf32> to vector<8x4xf32>
    %51 = arith.mulf %19, %50 : vector<8x4xf32>
    %52 = vector.broadcast %49 : vector<8x1xf32> to vector<8x4xf32>
    %53 = arith.addf %51, %52 : vector<8x4xf32>
    %cst_25 = arith.constant 0.000000e+00 : f32
    %54 = vector.broadcast %cst_25 : f32 to vector<8x4xf32>
    %55 = arith.maximumf %53, %54 : vector<8x4xf32>
    %c0_26 = arith.constant 0 : index
    %c0_27 = arith.constant 0 : index
    %56 = vector.load %arg9[%c0_26, %c0_27] : memref<8x4xf32, #tpu.memory_space<vmem>>, vector<8x4xf32>
    tpu.vector_store %arg9[%c0_26, %c0_27], %55 {strides = array<i32>} : memref<8x4xf32, #tpu.memory_space<vmem>>, vector<8x4xf32>,
    return
  }
}

</mosaic_0001>

<llo_original>
// kernel: tpu_custom_call.1
$region0: #{tpu_custom_call.1}
  #allocation0 [shape = 'u32[]', space=smem, size = 0x4, offset = 0x4, fixed_abs, tag = 'smem constant byte address 0x4 - core index']
  #allocation1 [shape = 'u32[144,128]{1,0:T(1,128)}', space=vmem, size = 0x12000, scoped, tag = 'internal scratch']
  %s0 = inlined_call_operand.vmem [shape: f32[28,48], index: 0, kind: input, shape index: {}]
  %s1 = inlined_call_operand.vmem [shape: f32[48,64], index: 1, kind: input, shape index: {}]
  %s2 = inlined_call_operand.vmem [shape: f32[1,64], index: 2, kind: input, shape index: {}]
  %s3 = inlined_call_operand.vmem [shape: f32[28,64], index: 3, kind: input, shape index: {}]
  %s4 = inlined_call_operand.vmem [shape: f32[64,32], index: 4, kind: input, shape index: {}]
  %s5 = inlined_call_operand.vmem [shape: f32[8,64], index: 5, kind: input, shape index: {}]
  %s6 = inlined_call_operand.vmem [shape: f32[32,4], index: 6, kind: input, shape index: {}]
  %s7 = inlined_call_operand.vmem [shape: f32[4,1], index: 7, kind: input, shape index: {}]
  %s8 = inlined_call_operand.vmem [shape: f32[4,1], index: 8, kind: input, shape index: {}]
  %s9 = inlined_call_operand.vmem [shape: f32[8,4], index: 9, kind: output, shape index: {}]
  %s10 = sld [smem:[#allocation0]]
  $region46: #{tpu_custom_call.1} parent=0
    _
  %s12 = ssub.s32 1, %s10
  %s13 = scalar_select 0, %s12, %s10
  // Predicated region
  $region2: #{tpu_custom_call.1} parent=0 // pred_check
    _
  $region3: #{tpu_custom_call.1} parent=0 // pred_check_branch
    %15 = sbr.rel (0) target = $region5
  $region4: #{tpu_custom_call.1} parent=0 // pred_region
    _
  $region5: #{tpu_custom_call.1} parent=0 // pred_fallthru
    _
  // Predicated region
  $region6: #{tpu_custom_call.1} parent=0 // pred_check
    _
  $region7: #{tpu_custom_call.1} parent=0 // pred_check_branch
    %17 = sbr.rel (0) target = $region9
  $region8: #{tpu_custom_call.1} parent=0 // pred_region
    _
  $region9: #{tpu_custom_call.1} parent=0 // pred_fallthru
    _
  // Predicated region
  $region10: #{tpu_custom_call.1} parent=0 // pred_check
    _
  $region11: #{tpu_custom_call.1} parent=0 // pred_check_branch
    %19 = sbr.rel (0) target = $region13
  $region12: #{tpu_custom_call.1} parent=0 // pred_region
    _
  $region13: #{tpu_custom_call.1} parent=0 // pred_fallthru
    _
  // Predicated region
  $region14: #{tpu_custom_call.1} parent=0 // pred_check
    _
  $region15: #{tpu_custom_call.1} parent=0 // pred_check_branch
    %21 = sbr.rel (0) target = $region17
  $region16: #{tpu_custom_call.1} parent=0 // pred_region
    _
  $region17: #{tpu_custom_call.1} parent=0 // pred_fallthru
    _
  // Predicated region
  $region18: #{tpu_custom_call.1} parent=0 // pred_check
    _
  $region19: #{tpu_custom_call.1} parent=0 // pred_check_branch
    %23 = sbr.rel (0) target = $region21
  $region20: #{tpu_custom_call.1} parent=0 // pred_region
    _
  $region21: #{tpu_custom_call.1} parent=0 // pred_fallthru
    _
  // Predicated region
  $region22: #{tpu_custom_call.1} parent=0 // pred_check
    _
  $region23: #{tpu_custom_call.1} parent=0 // pred_check_branch
    %25 = sbr.rel (0) target = $region25
  $region24: #{tpu_custom_call.1} parent=0 // pred_region
    _
  $region25: #{tpu_custom_call.1} parent=0 // pred_fallthru
    _
  // Predicated region
  $region26: #{tpu_custom_call.1} parent=0 // pred_check
    _
  $region27: #{tpu_custom_call.1} parent=0 // pred_check_branch
    %27 = sbr.rel (0) target = $region29
  $region28: #{tpu_custom_call.1} parent=0 // pred_region
    _
  $region29: #{tpu_custom_call.1} parent=0 // pred_fallthru
    _
  // Predicated region
  $region30: #{tpu_custom_call.1} parent=0 // pred_check
    _
  $region31: #{tpu_custom_call.1} parent=0 // pred_check_branch
    %29 = sbr.rel (0) target = $region33
  $region32: #{tpu_custom_call.1} parent=0 // pred_region
    _
  $region33: #{tpu_custom_call.1} parent=0 // pred_fallthru
    _
  // Predicated region
  $region34: #{tpu_custom_call.1} parent=0 // pred_check
    _
  $region35: #{tpu_custom_call.1} parent=0 // pred_check_branch
    %31 = sbr.rel (0) target = $region37
  $region36: #{tpu_custom_call.1} parent=0 // pred_region
    _
  $region37: #{tpu_custom_call.1} parent=0 // pred_fallthru
    _
  %v32 = vld [vmem:[%s0] sm:$0xff]
  %v33 = vld [vmem:[%s0 + $0x8] sm:$0xff]
  %v34 = vld [vmem:[%s0 + $0x10] sm:$0xff]
  %v35 = vld [vmem:[%s0 + $0x18] sm:$0xf]
  %v36 = vld [vmem:[%s1] sm:$0xff]
  %v37 = vld [vmem:[%s1 + $0x8] sm:$0xff]
  %v38 = vld [vmem:[%s1 + $0x10] sm:$0xff]
  %v39 = vld [vmem:[%s1 + $0x18] sm:$0xff]
  %v40 = vld [vmem:[%s1 + $0x20] sm:$0xff]
  %v41 = vld [vmem:[%s1 + $0x28] sm:$0xff]
  %v42 = vld [vmem:[%s2] sm:$0x1]
  %v44 = vlaneseq
  %v45 = vshrl.u32 %v44, 7
  %v46 = vsub.s32 0, %v45
  %v47 = vrot.slane %v42, %v46
  %vm49 = vcmask 392192
  %v51 = vsel %vm49, %v32, 0
  %v54 = vsel %vm49, %v33, 0
  %v57 = vsel %vm49, %v34, 0
  %v60 = vsel %vm49, %v35, 0
  %62 = vmatprep.subr.mxu0 0.0
  %63 = vmatpush1.msra.mxu0 %v36
  %64 = vmatprep.subr.mxu0 0.0
  %65 = vmatpush1.msra.mxu0 %v37
  %66 = vmatprep.subr.mxu0 0.0
  %67 = vmatpush1.msra.mxu0 %v38
  %68 = vmatprep.subr.mxu0 0.0
  %69 = vmatpush1.msra.mxu0 %v39
  %70 = vmatprep.subr.mxu0 0.0
  %71 = vmatpush1.msra.mxu0 %v40
  %72 = vmatprep.subr.mxu0 0.0
  %73 = vmatpush1.msra.mxu0 %v41
  %74 = vmatprep.subr.mxu0 0.0
  %75 = vmatpush1.msra.mxu0 0.0
  %76 = vmatprep.subr.mxu0 0.0
  %77 = vmatpush1.msra.mxu0 0.0
  %78 = vmatprep.subr.mxu0 0.0
  %79 = vmatpush1.msra.mxu0 0.0
  %80 = vmatprep.subr.mxu0 0.0
  %81 = vmatpush1.msra.mxu0 0.0
  %82 = vmatprep.subr.mxu0 0.0
  %83 = vmatpush1.msra.mxu0 0.0
  %84 = vmatprep.subr.mxu0 0.0
  %85 = vmatpush1.msra.mxu0 0.0
  %86 = vmatprep.subr.mxu0 0.0
  %87 = vmatpush1.msra.mxu0 0.0
  %88 = vmatprep.subr.mxu0 0.0
  %89 = vmatpush1.msra.mxu0 0.0
  %90 = vmatprep.subr.mxu0 0.0
  %91 = vmatpush1.msra.mxu0 0.0
  %92 = vmatprep.subr.mxu0 0.0
  %93 = vmatpush1.msra.mxu0 0.0
  %94 = vmatprep.subr.mxu0 0.0
  %95 = vmatpush1.msra.mxu0 0.0
  %96 = vmatprep.subr.mxu0 0.0
  %97 = vmatpush1.msra.mxu0 0.0
  %98 = vmatprep.subr.mxu0 0.0
  %99 = vmatpush1.msra.mxu0 0.0
  %100 = vmatprep.subr.mxu0 0.0
  %101 = vmatpush1.msra.mxu0 0.0
  %102 = vmatprep.subr.mxu0 0.0
  %103 = vmatpush1.msra.mxu0 0.0
  %104 = vmatprep.subr.mxu0 0.0
  %105 = vmatpush1.msra.mxu0 0.0
  %106 = vmatprep.subr.mxu0 0.0
  %107 = vmatpush1.msra.mxu0 0.0
  %108 = vmatprep.subr.mxu0 0.0
  %109 = vmatpush1.msra.mxu0 0.0
  %110 = vmatprep.subr.mxu0 0.0
  %111 = vmatpush1.msra.mxu0 0.0
  %112 = vmatprep.subr.mxu0 0.0
  %113 = vmatpush1.msra.mxu0 0.0
  %114 = vmatprep.subr.mxu0 0.0
  %115 = vmatpush1.msra.mxu0 0.0
  %116 = vmatprep.subr.mxu0 0.0
  %117 = vmatpush1.msra.mxu0 0.0
  %118 = vmatprep.subr.mxu0 0.0
  %119 = vmatpush1.msra.mxu0 0.0
  %120 = vmatprep.subr.mxu0 0.0
  %121 = vmatpush1.msra.mxu0 0.0
  %122 = vmatprep.subr.mxu0 0.0
  %123 = vmatpush1.msra.mxu0 0.0
  %124 = vmatprep.subr.mxu0 0.0
  %125 = vmatpush1.msra.mxu0 0.0
  %126 = vmatprep.mubr.f32.mxu0 0.0
  %127 = vmatmul.mubr.f32.gmra.mrb[0].mxu0 %v51
  %v128 = vpop.f32.mrb[0].mxu0
  %v129 = vadd.f32 %v47, %v128
  %v130 = vpop.f32.mrb[0].mxu0
  %131 = vmatprep.mubr.f32.mxu0 0.0
  %132 = vmatmul.mubr.f32.gmra.mrb[0].mxu0 %v54
  %v133 = vpop.f32.mrb[0].mxu0
  %v134 = vadd.f32 %v47, %v133
  %v135 = vpop.f32.mrb[0].mxu0
  %136 = vmatprep.mubr.f32.mxu0 0.0
  %137 = vmatmul.mubr.f32.gmra.mrb[0].mxu0 %v57
  %v138 = vpop.f32.mrb[0].mxu0
  %v139 = vadd.f32 %v47, %v138
  %v140 = vpop.f32.mrb[0].mxu0
  %141 = vmatprep.mubr.f32.mxu0 0.0
  %142 = vmatmul.mubr.f32.gmra.mrb[0].mxu0 %v60
  %v143 = vpop.f32.mrb[0].mxu0
  %v144 = vadd.f32 %v47, %v143
  %v145 = vpop.f32.mrb[0].mxu0
  %146 = vdwg.mxu0
  %151 = vrot.lane.b32.xlu0 %v129, 32
  %v152 = vpop.permute.xlu0 %151
  %153 = vrot.lane.b32.xlu0 %v134, 32
  %v154 = vpop.permute.xlu0 %153
  %155 = vrot.lane.b32.xlu0 %v139, 32
  %v156 = vpop.permute.xlu0 %155
  %157 = vrot.lane.b32.xlu0 %v144, 32
  %v158 = vpop.permute.xlu0 %157
  %vm163 = vcmask 261120
  %v164 = vsel %vm163, %v129, %v152
  %v165 = vsel %vm163, %v134, %v154
  %v166 = vsel %vm163, %v139, %v156
  %v167 = vsel %vm163, %v144, %v158
  %v168 = vld [vmem:[%s3] sm:$0xff]
  %v169 = vld [vmem:[%s3 + $0x8] sm:$0xff]
  %v170 = vld [vmem:[%s3 + $0x10] sm:$0xff]
  %v171 = vld [vmem:[%s3 + $0x18] sm:$0xf]
  %v172 = vmul.f32 %v164, %v168
  %v173 = vmul.f32 %v165, %v169
  %v174 = vmul.f32 %v166, %v170
  %v175 = vmul.f32 %v167, %v171
  %176 = vxpose.xlu0.b32.start [1/16] %v172, 128
  %177 = vxpose.xlu0.b32.cont [2/16] %v173, 128
  %178 = vxpose.xlu0.b32.cont [3/16] %v174, 128
  %179 = vxpose.xlu0.b32.cont [4/16] %v175, 128
  %180 = vxpose.xlu0.b32.cont [5/16] 0.0, 128
  %181 = vxpose.xlu0.b32.cont [6/16] 0.0, 128
  %182 = vxpose.xlu0.b32.cont [7/16] 0.0, 128
  %183 = vxpose.xlu0.b32.cont [8/16] 0.0, 128
  %184 = vxpose.xlu0.b32.cont [9/16] 0.0, 128
  %185 = vxpose.xlu0.b32.cont [10/16] 0.0, 128
  %186 = vxpose.xlu0.b32.cont [11/16] 0.0, 128
  %187 = vxpose.xlu0.b32.cont [12/16] 0.0, 128
  %188 = vxpose.xlu0.b32.cont [13/16] 0.0, 128
  %189 = vxpose.xlu0.b32.cont [14/16] 0.0, 128
  %190 = vxpose.xlu0.b32.cont [15/16] 0.0, 128
  %191 = vxpose.xlu0.b32.end [16/16] 0.0, 128
  %v192 = vpop.trf.xlu0
  %v193 = vpop.trf.xlu0
  %v194 = vpop.trf.xlu0
  %v195 = vpop.trf.xlu0
  %v196 = vpop.trf.xlu0
  %v197 = vpop.trf.xlu0
  %v198 = vpop.trf.xlu0
  %v199 = vpop.trf.xlu0
  %v200 = vpop.trf.xlu0
  %v201 = vpop.trf.xlu0
  %v202 = vpop.trf.xlu0
  %v203 = vpop.trf.xlu0
  %v204 = vpop.trf.xlu0
  %v205 = vpop.trf.xlu0
  %v206 = vpop.trf.xlu0
  %v207 = vpop.trf.xlu0
  %208 = vrot.lane.b32.xlu0 %v129, 96
  %v209 = vpop.permute.xlu0 %208
  %210 = vrot.lane.b32.xlu0 %v134, 96
  %v211 = vpop.permute.xlu0 %210
  %212 = vrot.lane.b32.xlu0 %v139, 96
  %v213 = vpop.permute.xlu0 %212
  %214 = vrot.lane.b32.xlu0 %v144, 96
  %v215 = vpop.permute.xlu0 %214
  %vm219 = vcmask 228352
  %v221 = vsel %vm219, %v192, 0
  %v224 = vsel %vm219, %v193, 0
  %v227 = vsel %vm219, %v194, 0
  %v230 = vsel %vm219, %v195, 0
  %v233 = vsel %vm219, %v196, 0
  %v236 = vsel %vm219, %v197, 0
  %v239 = vsel %vm219, %v198, 0
  %v242 = vsel %vm219, %v199, 0
  %vm244 = vcmask 1043456
  %v245 = vsel %vm244, %v215, 0
  %247 = vmatprep.subr.mxu0 0.0
  %248 = vmatpush1.msra.mxu0 %v209
  %249 = vmatprep.subr.mxu0 0.0
  %250 = vmatpush1.msra.mxu0 %v211
  %251 = vmatprep.subr.mxu0 0.0
  %252 = vmatpush1.msra.mxu0 %v213
  %253 = vmatprep.subr.mxu0 0.0
  %254 = vmatpush1.msra.mxu0 %v245
  %255 = vmatprep.subr.mxu0 0.0
  %256 = vmatpush1.msra.mxu0 0.0
  %257 = vmatprep.subr.mxu0 0.0
  %258 = vmatpush1.msra.mxu0 0.0
  %259 = vmatprep.subr.mxu0 0.0
  %260 = vmatpush1.msra.mxu0 0.0
  %261 = vmatprep.subr.mxu0 0.0
  %262 = vmatpush1.msra.mxu0 0.0
  %263 = vmatprep.subr.mxu0 0.0
  %264 = vmatpush1.msra.mxu0 0.0
  %265 = vmatprep.subr.mxu0 0.0
  %266 = vmatpush1.msra.mxu0 0.0
  %267 = vmatprep.subr.mxu0 0.0
  %268 = vmatpush1.msra.mxu0 0.0
  %269 = vmatprep.subr.mxu0 0.0
  %270 = vmatpush1.msra.mxu0 0.0
  %271 = vmatprep.subr.mxu0 0.0
  %272 = vmatpush1.msra.mxu0 0.0
  %273 = vmatprep.subr.mxu0 0.0
  %274 = vmatpush1.msra.mxu0 0.0
  %275 = vmatprep.subr.mxu0 0.0
  %276 = vmatpush1.msra.mxu0 0.0
  %277 = vmatprep.subr.mxu0 0.0
  %278 = vmatpush1.msra.mxu0 0.0
  %279 = vmatprep.subr.mxu0 0.0
  %280 = vmatpush1.msra.mxu0 0.0
  %281 = vmatprep.subr.mxu0 0.0
  %282 = vmatpush1.msra.mxu0 0.0
  %283 = vmatprep.subr.mxu0 0.0
  %284 = vmatpush1.msra.mxu0 0.0
  %285 = vmatprep.subr.mxu0 0.0
  %286 = vmatpush1.msra.mxu0 0.0
  %287 = vmatprep.subr.mxu0 0.0
  %288 = vmatpush1.msra.mxu0 0.0
  %289 = vmatprep.subr.mxu0 0.0
  %290 = vmatpush1.msra.mxu0 0.0
  %291 = vmatprep.subr.mxu0 0.0
  %292 = vmatpush1.msra.mxu0 0.0
  %293 = vmatprep.subr.mxu0 0.0
  %294 = vmatpush1.msra.mxu0 0.0
  %295 = vmatprep.subr.mxu0 0.0
  %296 = vmatpush1.msra.mxu0 0.0
  %297 = vmatprep.subr.mxu0 0.0
  %298 = vmatpush1.msra.mxu0 0.0
  %299 = vmatprep.subr.mxu0 0.0
  %300 = vmatpush1.msra.mxu0 0.0
  %301 = vmatprep.subr.mxu0 0.0
  %302 = vmatpush1.msra.mxu0 0.0
  %303 = vmatprep.subr.mxu0 0.0
  %304 = vmatpush1.msra.mxu0 0.0
  %305 = vmatprep.subr.mxu0 0.0
  %306 = vmatpush1.msra.mxu0 0.0
  %307 = vmatprep.subr.mxu0 0.0
  %308 = vmatpush1.msra.mxu0 0.0
  %309 = vmatprep.subr.mxu0 0.0
  %310 = vmatpush1.msra.mxu0 0.0
  %311 = vmatprep.mubr.f32.mxu0 0.0
  %312 = vmatmul.mubr.f32.gmra.mrb[0].mxu0 %v221
  %v313 = vpop.f32.mrb[0].mxu0
  %v314 = vadd.f32 0.0, %v313
  %v315 = vpop.f32.mrb[0].mxu0
  %316 = vmatprep.mubr.f32.mxu0 0.0
  %317 = vmatmul.mubr.f32.gmra.mrb[0].mxu0 %v224
  %v318 = vpop.f32.mrb[0].mxu0
  %v319 = vadd.f32 0.0, %v318
  %v320 = vpop.f32.mrb[0].mxu0
  %321 = vmatprep.mubr.f32.mxu0 0.0
  %322 = vmatmul.mubr.f32.gmra.mrb[0].mxu0 %v227
  %v323 = vpop.f32.mrb[0].mxu0
  %v324 = vadd.f32 0.0, %v323
  %v325 = vpop.f32.mrb[0].mxu0
  %326 = vmatprep.mubr.f32.mxu0 0.0
  %327 = vmatmul.mubr.f32.gmra.mrb[0].mxu0 %v230
  %v328 = vpop.f32.mrb[0].mxu0
  %v329 = vadd.f32 0.0, %v328
  %v330 = vpop.f32.mrb[0].mxu0
  %331 = vmatprep.mubr.f32.mxu0 0.0
  %332 = vmatmul.mubr.f32.gmra.mrb[0].mxu0 %v233
  %v333 = vpop.f32.mrb[0].mxu0
  %v334 = vadd.f32 0.0, %v333
  %v335 = vpop.f32.mrb[0].mxu0
  %336 = vmatprep.mubr.f32.mxu0 0.0
  %337 = vmatmul.mubr.f32.gmra.mrb[0].mxu0 %v236
  %v338 = vpop.f32.mrb[0].mxu0
  %v339 = vadd.f32 0.0, %v338
  %v340 = vpop.f32.mrb[0].mxu0
  %341 = vmatprep.mubr.f32.mxu0 0.0
  %342 = vmatmul.mubr.f32.gmra.mrb[0].mxu0 %v239
  %v343 = vpop.f32.mrb[0].mxu0
  %v344 = vadd.f32 0.0, %v343
  %v345 = vpop.f32.mrb[0].mxu0
  %346 = vmatprep.mubr.f32.mxu0 0.0
  %347 = vmatmul.mubr.f32.gmra.mrb[0].mxu0 %v242
  %v348 = vpop.f32.mrb[0].mxu0
  %v349 = vadd.f32 0.0, %v348
  %v350 = vpop.f32.mrb[0].mxu0
  %351 = vdwg.mxu0
  %v352 = vld [vmem:[%s5] sm:$0xff]
  %v353 = vld [vmem:[%s4] sm:$0xff]
  %v354 = vld [vmem:[%s4 + $0x8] sm:$0xff]
  %v355 = vld [vmem:[%s4 + $0x10] sm:$0xff]
  %v356 = vld [vmem:[%s4 + $0x18] sm:$0xff]
  %v357 = vld [vmem:[%s4 + $0x20] sm:$0xff]
  %v358 = vld [vmem:[%s4 + $0x28] sm:$0xff]
  %v359 = vld [vmem:[%s4 + $0x30] sm:$0xff]
  %v360 = vld [vmem:[%s4 + $0x38] sm:$0xff]
  %v361 = vmul.f32 %v314, %v353
  %v362 = vmul.f32 %v319, %v354
  %v363 = vmul.f32 %v324, %v355
  %v364 = vmul.f32 %v329, %v356
  %v365 = vmul.f32 %v334, %v357
  %v366 = vmul.f32 %v339, %v358
  %v367 = vmul.f32 %v344, %v359
  %v368 = vmul.f32 %v349, %v360
  %vm369 = vcmask 523264
  %v371 = vsel %vm369, %v352, 0
  %373 = vmatprep.subr.mxu0 0.0
  %374 = vmatpush1.msra.mxu0 %v361
  %375 = vmatprep.subr.mxu0 0.0
  %376 = vmatpush1.msra.mxu0 %v362
  %377 = vmatprep.subr.mxu0 0.0
  %378 = vmatpush1.msra.mxu0 %v363
  %379 = vmatprep.subr.mxu0 0.0
  %380 = vmatpush1.msra.mxu0 %v364
  %381 = vmatprep.subr.mxu0 0.0
  %382 = vmatpush1.msra.mxu0 %v365
  %383 = vmatprep.subr.mxu0 0.0
  %384 = vmatpush1.msra.mxu0 %v366
  %385 = vmatprep.subr.mxu0 0.0
  %386 = vmatpush1.msra.mxu0 %v367
  %387 = vmatprep.subr.mxu0 0.0
  %388 = vmatpush1.msra.mxu0 %v368
  %389 = vmatprep.subr.mxu0 0.0
  %390 = vmatpush1.msra.mxu0 0.0
  %391 = vmatprep.subr.mxu0 0.0
  %392 = vmatpush1.msra.mxu0 0.0
  %393 = vmatprep.subr.mxu0 0.0
  %394 = vmatpush1.msra.mxu0 0.0
  %395 = vmatprep.subr.mxu0 0.0
  %396 = vmatpush1.msra.mxu0 0.0
  %397 = vmatprep.subr.mxu0 0.0
  %398 = vmatpush1.msra.mxu0 0.0
  %399 = vmatprep.subr.mxu0 0.0
  %400 = vmatpush1.msra.mxu0 0.0
  %401 = vmatprep.subr.mxu0 0.0
  %402 = vmatpush1.msra.mxu0 0.0
  %403 = vmatprep.subr.mxu0 0.0
  %404 = vmatpush1.msra.mxu0 0.0
  %405 = vmatprep.subr.mxu0 0.0
  %406 = vmatpush1.msra.mxu0 0.0
  %407 = vmatprep.subr.mxu0 0.0
  %408 = vmatpush1.msra.mxu0 0.0
  %409 = vmatprep.subr.mxu0 0.0
  %410 = vmatpush1.msra.mxu0 0.0
  %411 = vmatprep.subr.mxu0 0.0
  %412 = vmatpush1.msra.mxu0 0.0
  %413 = vmatprep.subr.mxu0 0.0
  %414 = vmatpush1.msra.mxu0 0.0
  %415 = vmatprep.subr.mxu0 0.0
  %416 = vmatpush1.msra.mxu0 0.0
  %417 = vmatprep.subr.mxu0 0.0
  %418 = vmatpush1.msra.mxu0 0.0
  %419 = vmatprep.subr.mxu0 0.0
  %420 = vmatpush1.msra.mxu0 0.0
  %421 = vmatprep.subr.mxu0 0.0
  %422 = vmatpush1.msra.mxu0 0.0
  %423 = vmatprep.subr.mxu0 0.0
  %424 = vmatpush1.msra.mxu0 0.0
  %425 = vmatprep.subr.mxu0 0.0
  %426 = vmatpush1.msra.mxu0 0.0
  %427 = vmatprep.subr.mxu0 0.0
  %428 = vmatpush1.msra.mxu0 0.0
  %429 = vmatprep.subr.mxu0 0.0
  %430 = vmatpush1.msra.mxu0 0.0
  %431 = vmatprep.subr.mxu0 0.0
  %432 = vmatpush1.msra.mxu0 0.0
  %433 = vmatprep.subr.mxu0 0.0
  %434 = vmatpush1.msra.mxu0 0.0
  %435 = vmatprep.subr.mxu0 0.0
  %436 = vmatpush1.msra.mxu0 0.0
  %437 = vmatprep.mubr.f32.mxu0 0.0
  %438 = vmatmul.mubr.f32.gmra.mrb[0].mxu0 %v371
  %v439 = vpop.f32.mrb[0].mxu0
  %v440 = vadd.f32 0.0, %v439
  %v441 = vpop.f32.mrb[0].mxu0
  %442 = vdwg.mxu0
  %v443 = vld [vmem:[%s6] sm:$0xff]
  %v444 = vld [vmem:[%s6 + $0x8] sm:$0xff]
  %v445 = vld [vmem:[%s6 + $0x10] sm:$0xff]
  %v446 = vld [vmem:[%s6 + $0x18] sm:$0xff]
  %v448 = vsel %vm163, %v440, 0
  %450 = vmatprep.subr.mxu0 0.0
  %451 = vmatpush1.msra.mxu0 %v443
  %452 = vmatprep.subr.mxu0 0.0
  %453 = vmatpush1.msra.mxu0 %v444
  %454 = vmatprep.subr.mxu0 0.0
  %455 = vmatpush1.msra.mxu0 %v445
  %456 = vmatprep.subr.mxu0 0.0
  %457 = vmatpush1.msra.mxu0 %v446
  %458 = vmatprep.subr.mxu0 0.0
  %459 = vmatpush1.msra.mxu0 0.0
  %460 = vmatprep.subr.mxu0 0.0
  %461 = vmatpush1.msra.mxu0 0.0
  %462 = vmatprep.subr.mxu0 0.0
  %463 = vmatpush1.msra.mxu0 0.0
  %464 = vmatprep.subr.mxu0 0.0
  %465 = vmatpush1.msra.mxu0 0.0
  %466 = vmatprep.subr.mxu0 0.0
  %467 = vmatpush1.msra.mxu0 0.0
  %468 = vmatprep.subr.mxu0 0.0
  %469 = vmatpush1.msra.mxu0 0.0
  %470 = vmatprep.subr.mxu0 0.0
  %471 = vmatpush1.msra.mxu0 0.0
  %472 = vmatprep.subr.mxu0 0.0
  %473 = vmatpush1.msra.mxu0 0.0
  %474 = vmatprep.subr.mxu0 0.0
  %475 = vmatpush1.msra.mxu0 0.0
  %476 = vmatprep.subr.mxu0 0.0
  %477 = vmatpush1.msra.mxu0 0.0
  %478 = vmatprep.subr.mxu0 0.0
  %479 = vmatpush1.msra.mxu0 0.0
  %480 = vmatprep.subr.mxu0 0.0
  %481 = vmatpush1.msra.mxu0 0.0
  %482 = vmatprep.subr.mxu0 0.0
  %483 = vmatpush1.msra.mxu0 0.0
  %484 = vmatprep.subr.mxu0 0.0
  %485 = vmatpush1.msra.mxu0 0.0
  %486 = vmatprep.subr.mxu0 0.0
  %487 = vmatpush1.msra.mxu0 0.0
  %488 = vmatprep.subr.mxu0 0.0
  %489 = vmatpush1.msra.mxu0 0.0
  %490 = vmatprep.subr.mxu0 0.0
  %491 = vmatpush1.msra.mxu0 0.0
  %492 = vmatprep.subr.mxu0 0.0
  %493 = vmatpush1.msra.mxu0 0.0
  %494 = vmatprep.subr.mxu0 0.0
  %495 = vmatpush1.msra.mxu0 0.0
  %496 = vmatprep.subr.mxu0 0.0
  %497 = vmatpush1.msra.mxu0 0.0
  %498 = vmatprep.subr.mxu0 0.0
  %499 = vmatpush1.msra.mxu0 0.0
  %500 = vmatprep.subr.mxu0 0.0
  %501 = vmatpush1.msra.mxu0 0.0
  %502 = vmatprep.subr.mxu0 0.0
  %503 = vmatpush1.msra.mxu0 0.0
  %504 = vmatprep.subr.mxu0 0.0
  %505 = vmatpush1.msra.mxu0 0.0
  %506 = vmatprep.subr.mxu0 0.0
  %507 = vmatpush1.msra.mxu0 0.0
  %508 = vmatprep.subr.mxu0 0.0
  %509 = vmatpush1.msra.mxu0 0.0
  %510 = vmatprep.subr.mxu0 0.0
  %511 = vmatpush1.msra.mxu0 0.0
  %512 = vmatprep.subr.mxu0 0.0
  %513 = vmatpush1.msra.mxu0 0.0
  %514 = vmatprep.mubr.f32.mxu0 0.0
  %515 = vmatmul.mubr.f32.gmra.mrb[0].mxu0 %v448
  %v516 = vpop.f32.mrb[0].mxu0
  %v517 = vadd.f32 0.0, %v516
  %v518 = vpop.f32.mrb[0].mxu0
  %519 = vdwg.mxu0
  %v520 = vtanh.pop %v517
  %v522 = vrot.slane %v520, 4
  %v524 = vadd.f32 %v520, %v522
  %vm525 = vcmask 27648
  %v526 = vsel %vm525, %v524, 0.0
  %527 = vadd.xlane.f32.xlu0 %v526
  %v528 = vpop.xlane.xlu0 %527
  %v529 = vrcp.pop 8.0
  %v530 = vmul.f32 %v528, %v529
  %v531 = vsub.f32 %v520, %v530
  %v532 = vmul.f32 %v531, %v531
  %v534 = vrot.slane %v530, 4
  %v536 = vsub.f32 %v520, %v534
  %v537 = vmul.f32 %v536, %v536
  %v539 = vrot.slane %v537, 4
  %v541 = vadd.f32 %v532, %v539
  %v542 = vsel %vm525, %v541, 0.0
  %543 = vadd.xlane.f32.xlu0 %v542
  %v544 = vpop.xlane.xlu0 %543
  %v545 = vmul.f32 %v544, %v529
  %v546 = vadd.f32 %v545, 1e-05
  %v547 = vrsqrt.pop %v546
  %v548 = vld [vmem:[%s7] sm:$0xf]
  %v549 = vmul.f32 %v548, %v547
  %v550 = vld [vmem:[%s8] sm:$0xf]
  %v551 = vmul.f32 %v549, %v530
  %v552 = vsub.f32 %v550, %v551
  %v554 = vrot.slane %v549, 4
  %v556 = vsel %vm244, %v549, %v554
  %v558 = vrot.slane %v552, 4
  %v560 = vsel %vm244, %v552, %v558
  %562 = vset.pattern.permute.xlu0 0
  %563 = vperm.xlu0 %562, %v556
  %v564 = vpop.permute.xlu0 %563
  %v566 = vmul.f32 %v520, %v564
  %568 = vset.pattern.permute.xlu0 0
  %569 = vperm.xlu0 %568, %v560
  %v570 = vpop.permute.xlu0 %569
  %v572 = vadd.f32 %v566, %v570
  %v573 = vmax.f32 %v572, 0.0
  %vm574 = vcmask 31744
  %575 = vst.msk [vmem:[%s9] sm:$0xff] %vm574, %v573
  // Predicated region
  $region38: #{tpu_custom_call.1} parent=0 // pred_check
    _
  $region39: #{tpu_custom_call.1} parent=0 // pred_check_branch
    %577 = sbr.rel (0) target = $region41
  $region40: #{tpu_custom_call.1} parent=0 // pred_region
    _
  $region41: #{tpu_custom_call.1} parent=0 // pred_fallthru
    _
  // Predicated region
  $region42: #{tpu_custom_call.1} parent=0 // pred_check
    _
  $region43: #{tpu_custom_call.1} parent=0 // pred_check_branch
    %579 = sbr.rel (0) target = $region45
  $region44: #{tpu_custom_call.1} parent=0 // pred_region
    _
  $region45: #{tpu_custom_call.1} parent=0 // pred_fallthru
    _

</llo_original>
